<compile_context>
chip_gen: v6e
topology: v6e:2x2x1
jax: 0.10.0
libtpu: 0.0.40
codegen_flags: <defaults>
</compile_context>

<pallas_src>
import jax
import jax.numpy as jnp
import numpy as np
from jax.experimental import pallas as pl
from jax.experimental.pallas import tpu as pltpu

KD = KH = KW = 3          # fixed 3x3x3 kernel (module default)
_LANE = 128


def _conv3d_gemm_relu_kernel(x_ref, w_ref, b_ref, o_ref):
    """One grid step = (batch n, depth block db).

    x_ref : (1, TD, HW, K)   bf16  im2col'd input rows (K = 27*Cin)
    w_ref : (K, Cp)          bf16  flattened weights, Cout padded to Cp (mult of 128)
    b_ref : (1, Cp)          f32   bias (padded)
    o_ref : (1, TD, HW, Cp)  f32   output block
    """
    TD = x_ref.shape[1]
    w = w_ref[...]                   # resident (K, Cp) bf16 slab
    bias = b_ref[...]                # (1, Cp) f32

    for d in range(TD):              # static unroll over the depth block
        lhs = x_ref[0, d]            # (HW, K) bf16 — aligned chunked load
        acc = jnp.dot(lhs, w, preferred_element_type=jnp.float32)   # MXU, K-deep
        acc = jnp.maximum(acc + bias, 0.0)                          # bias + ReLU (f32)
        o_ref[0, d] = acc.astype(o_ref.dtype)


def conv_block_3d(x_ncdhw, weight_oikkk, bias_o):
    """ConvBlock3D forward: Conv3d(3x3x3, 'same', zeros, bias) + ReLU.

    x_ncdhw:      (N, Cin, D, H, W)    (PyTorch layout)
    weight_oikkk: (Cout, Cin, 3, 3, 3) (PyTorch Conv3d weight layout)
    bias_o:       (Cout,)
    returns:      (N, Cout, D, H, W)
    """
    N, Cin, D, H, W = x_ncdhw.shape
    Cout = weight_oikkk.shape[0]
    HW = H * W
    K = KD * KH * KW * Cin
    Cp = -(-Cout // _LANE) * _LANE           # lane-dense padded Cout

    # ---- wrapper-side layout plumbing: NCDHW -> NDHWC, zero pad, im2col ----
    x = jnp.transpose(x_ncdhw, (0, 2, 3, 4, 1))                       # (N, D, H, W, Cin)
    xp = jnp.pad(x, ((0, 0), (1, 1), (1, 1), (1, 1), (0, 0)))         # 'same' for k=3
    cols = [xp[:, kd:kd + D, kh:kh + H, kw:kw + W, :]
            for kd in range(KD) for kh in range(KH) for kw in range(KW)]
    x_col = jnp.concatenate(cols, axis=-1)                            # (N, D, H, W, 27*Cin)
    x_col = x_col.reshape(N, D, HW, K).astype(jnp.bfloat16)

    # weights -> one contiguous lane-dense (K, Cp) slab, bf16; bias -> (1, Cp) f32
    w = jnp.transpose(weight_oikkk, (2, 3, 4, 1, 0)).reshape(K, Cout)  # (kd,kh,kw,Cin),Cout
    w = jnp.pad(w, ((0, 0), (0, Cp - Cout))).astype(jnp.bfloat16)
    b = jnp.pad(bias_o.astype(jnp.float32), (0, Cp - Cout)).reshape(1, Cp)

    # ---- depth blocking: TD output depths per grid step (no halo needed) ----
    bytes_per_depth = HW * (K * 2 + Cp * 4)
    TD = max(1, min(D, 8, (4 << 20) // max(bytes_per_depth, 1)))
    Dp = -(-D // TD) * TD
    if Dp != D:
        x_col = jnp.pad(x_col, ((0, 0), (0, Dp - D), (0, 0), (0, 0)))

    # explicit scoped-VMEM budget: 2x double-buffered in/out blocks + weights + slack
    in_blk = TD * HW * K * 2
    out_blk = TD * HW * Cp * 4
    vmem_need = 2 * in_blk + 2 * out_blk + K * Cp * 2 + Cp * 4 + (4 << 20)
    vmem_limit = int(min(48 << 20, max(vmem_need, 16 << 20)))

    out = pl.pallas_call(
        _conv3d_gemm_relu_kernel,
        out_shape=jax.ShapeDtypeStruct((N, Dp, HW, Cp), jnp.float32),
        grid_spec=pltpu.PrefetchScalarGridSpec(
            num_scalar_prefetch=0,
            grid=(N, Dp // TD),
            in_specs=[
                pl.BlockSpec((1, TD, HW, K), lambda n, db: (n, db, 0, 0)),
                pl.BlockSpec((K, Cp), lambda n, db: (0, 0)),
                pl.BlockSpec((1, Cp), lambda n, db: (0, 0)),
            ],
            out_specs=pl.BlockSpec((1, TD, HW, Cp), lambda n, db: (n, db, 0, 0)),
        ),
        compiler_params=pltpu.CompilerParams(
            dimension_semantics=("parallel", "parallel"),
            vmem_limit_bytes=vmem_limit),
    )(x_col, w, b)

    # strip depth/Cout padding, back to PyTorch layout
    out = out[:, :D, :, :Cout].reshape(N, D, H, W, Cout)
    return jnp.transpose(out, (0, 4, 1, 2, 3)).astype(x_ncdhw.dtype)


def _reference(x_ncdhw, weight_oikkk, bias_o):
    """Pure-JAX reference with the same bf16 operand quantization, f32 accumulation."""
    xq = x_ncdhw.astype(jnp.bfloat16).astype(jnp.float32)
    wq = weight_oikkk.astype(jnp.bfloat16).astype(jnp.float32)
    y = jax.lax.conv_general_dilated(
        xq, wq,
        window_strides=(1, 1, 1),
        padding="SAME",
        dimension_numbers=("NCDHW", "OIDHW", "NCDHW"),
        precision=jax.lax.Precision.HIGHEST,
    )
    y = y + bias_o.astype(jnp.float32).reshape(1, -1, 1, 1, 1)
    return jnp.maximum(y, 0.0)


if __name__ == "__main__":
    key = jax.random.PRNGKey(0)
    k1, k2, k3 = jax.random.split(key, 3)

    N, Cin, Cout = 2, 4, 8
    D = H = W = 8

    x = jax.random.normal(k1, (N, Cin, D, H, W), dtype=jnp.float32)
    weight = jax.random.normal(k2, (Cout, Cin, KD, KH, KW), dtype=jnp.float32) * 0.1
    bias = jax.random.normal(k3, (Cout,), dtype=jnp.float32) * 0.1

    y = jax.block_until_ready(conv_block_3d(x, weight, bias))
    y_ref = jax.block_until_ready(_reference(x, weight, bias))

    assert y.shape == (N, Cout, D, H, W)
    np.testing.assert_allclose(np.asarray(y), np.asarray(y_ref), rtol=2e-3, atol=2e-3)

    print("KERNEL_OK")
</pallas_src>

<mosaic_0001>
module attributes {stable_mosaic.version = 11 : i64} {
  func.func @_conv3d_gemm_relu_kernel(%arg0: i32, %arg1: i32, %arg2: memref<1x8x64x108xbf16, #tpu.memory_space<vmem>>, %arg3: memref<108x128xbf16, #tpu.memory_space<vmem>>, %arg4: memref<1x128xf32, #tpu.memory_space<vmem>>, %arg5: memref<1x8x64x128xf32, #tpu.memory_space<vmem>>) attributes {dimension_semantics = [#tpu.dimension_semantics<parallel>, #tpu.dimension_semantics<parallel>], iteration_bounds = array<i64: 2, 1>, scalar_prefetch = 0 : i64, scratch_operands = 0 : i64, tpu.core_type = #tpu.core_type<tc>, window_params = [{transform_indices = @transform_0, window_bounds = array<i64: 1, 8, 64, 108>}, {pipeline_mode = #tpu.pipeline_mode<synchronous>, transform_indices = @transform_1, window_bounds = array<i64: 108, 128>}, {pipeline_mode = #tpu.pipeline_mode<synchronous>, transform_indices = @transform_2, window_bounds = array<i64: 1, 128>}, {transform_indices = @transform_3, window_bounds = array<i64: 1, 8, 64, 128>}]} {
    %c0 = arith.constant 0 : index
    %c0_0 = arith.constant 0 : index
    %0 = vector.load %arg3[%c0, %c0_0] : memref<108x128xbf16, #tpu.memory_space<vmem>>, vector<108x128xbf16>
    %c0_1 = arith.constant 0 : index
    %c0_2 = arith.constant 0 : index
    %1 = vector.load %arg4[%c0_1, %c0_2] : memref<1x128xf32, #tpu.memory_space<vmem>>, vector<1x128xf32>
    %c0_3 = arith.constant 0 : index
    %c0_4 = arith.constant 0 : index
    %c0_5 = arith.constant 0 : index
    %c0_6 = arith.constant 0 : index
    %2 = vector.load %arg2[%c0_3, %c0_4, %c0_5, %c0_6] : memref<1x8x64x108xbf16, #tpu.memory_space<vmem>>, vector<1x1x64x108xbf16>
    %3 = vector.shape_cast %2 : vector<1x1x64x108xbf16> to vector<64x108xbf16>
    %cst = arith.constant dense<0.000000e+00> : vector<64x128xf32>
    %4 = tpu.matmul %3, %0, %cst {dimension_numbers = #tpu.dot_dimension_numbers<[1], [0], [0], [1], [0, 0, 1, 1], [], []>} : vector<64x108xbf16>, vector<108x128xbf16>, vector<64x128xf32> -> vector<64x128xf32>
    %5 = vector.broadcast %1 : vector<1x128xf32> to vector<64x128xf32>
    %6 = arith.addf %4, %5 : vector<64x128xf32>
    %cst_7 = arith.constant 0.000000e+00 : f32
    %7 = vector.broadcast %cst_7 : f32 to vector<64x128xf32>
    %8 = arith.maximumf %6, %7 : vector<64x128xf32>
    %c0_8 = arith.constant 0 : index
    %c0_9 = arith.constant 0 : index
    %c0_10 = arith.constant 0 : index
    %c0_11 = arith.constant 0 : index
    %9 = vector.load %arg5[%c0_8, %c0_9, %c0_10, %c0_11] : memref<1x8x64x128xf32, #tpu.memory_space<vmem>>, vector<1x1x64x128xf32>
    %10 = vector.shape_cast %9 : vector<1x1x64x128xf32> to vector<64x128xf32>
    %11 = vector.shape_cast %8 : vector<64x128xf32> to vector<1x1x64x128xf32>
    tpu.vector_store %arg5[%c0_8, %c0_9, %c0_10, %c0_11], %11 {strides = array<i32>} : memref<1x8x64x128xf32, #tpu.memory_space<vmem>>, vector<1x1x64x128xf32>,
    %c0_12 = arith.constant 0 : index
    %c1 = arith.constant 1 : index
    %c0_13 = arith.constant 0 : index
    %c0_14 = arith.constant 0 : index
    %12 = vector.load %arg2[%c0_12, %c1, %c0_13, %c0_14] : memref<1x8x64x108xbf16, #tpu.memory_space<vmem>>, vector<1x1x64x108xbf16>
    %13 = vector.shape_cast %12 : vector<1x1x64x108xbf16> to vector<64x108xbf16>
    %cst_15 = arith.constant dense<0.000000e+00> : vector<64x128xf32>
    %14 = tpu.matmul %13, %0, %cst_15 {dimension_numbers = #tpu.dot_dimension_numbers<[1], [0], [0], [1], [0, 0, 1, 1], [], []>} : vector<64x108xbf16>, vector<108x128xbf16>, vector<64x128xf32> -> vector<64x128xf32>
    %15 = vector.broadcast %1 : vector<1x128xf32> to vector<64x128xf32>
    %16 = arith.addf %14, %15 : vector<64x128xf32>
    %cst_16 = arith.constant 0.000000e+00 : f32
    %17 = vector.broadcast %cst_16 : f32 to vector<64x128xf32>
    %18 = arith.maximumf %16, %17 : vector<64x128xf32>
    %c0_17 = arith.constant 0 : index
    %c1_18 = arith.constant 1 : index
    %c0_19 = arith.constant 0 : index
    %c0_20 = arith.constant 0 : index
    %19 = vector.load %arg5[%c0_17, %c1_18, %c0_19, %c0_20] : memref<1x8x64x128xf32, #tpu.memory_space<vmem>>, vector<1x1x64x128xf32>
    %20 = vector.shape_cast %19 : vector<1x1x64x128xf32> to vector<64x128xf32>
    %21 = vector.shape_cast %18 : vector<64x128xf32> to vector<1x1x64x128xf32>
    tpu.vector_store %arg5[%c0_17, %c1_18, %c0_19, %c0_20], %21 {strides = array<i32>} : memref<1x8x64x128xf32, #tpu.memory_space<vmem>>, vector<1x1x64x128xf32>,
    %c0_21 = arith.constant 0 : index
    %c2 = arith.constant 2 : index
    %c0_22 = arith.constant 0 : index
    %c0_23 = arith.constant 0 : index
    %22 = vector.load %arg2[%c0_21, %c2, %c0_22, %c0_23] : memref<1x8x64x108xbf16, #tpu.memory_space<vmem>>, vector<1x1x64x108xbf16>
    %23 = vector.shape_cast %22 : vector<1x1x64x108xbf16> to vector<64x108xbf16>
    %cst_24 = arith.constant dense<0.000000e+00> : vector<64x128xf32>
    %24 = tpu.matmul %23, %0, %cst_24 {dimension_numbers = #tpu.dot_dimension_numbers<[1], [0], [0], [1], [0, 0, 1, 1], [], []>} : vector<64x108xbf16>, vector<108x128xbf16>, vector<64x128xf32> -> vector<64x128xf32>
    %25 = vector.broadcast %1 : vector<1x128xf32> to vector<64x128xf32>
    %26 = arith.addf %24, %25 : vector<64x128xf32>
    %cst_25 = arith.constant 0.000000e+00 : f32
    %27 = vector.broadcast %cst_25 : f32 to vector<64x128xf32>
    %28 = arith.maximumf %26, %27 : vector<64x128xf32>
    %c0_26 = arith.constant 0 : index
    %c2_27 = arith.constant 2 : index
    %c0_28 = arith.constant 0 : index
    %c0_29 = arith.constant 0 : index
    %29 = vector.load %arg5[%c0_26, %c2_27, %c0_28, %c0_29] : memref<1x8x64x128xf32, #tpu.memory_space<vmem>>, vector<1x1x64x128xf32>
    %30 = vector.shape_cast %29 : vector<1x1x64x128xf32> to vector<64x128xf32>
    %31 = vector.shape_cast %28 : vector<64x128xf32> to vector<1x1x64x128xf32>
    tpu.vector_store %arg5[%c0_26, %c2_27, %c0_28, %c0_29], %31 {strides = array<i32>} : memref<1x8x64x128xf32, #tpu.memory_space<vmem>>, vector<1x1x64x128xf32>,
    %c0_30 = arith.constant 0 : index
    %c3 = arith.constant 3 : index
    %c0_31 = arith.constant 0 : index
    %c0_32 = arith.constant 0 : index
    %32 = vector.load %arg2[%c0_30, %c3, %c0_31, %c0_32] : memref<1x8x64x108xbf16, #tpu.memory_space<vmem>>, vector<1x1x64x108xbf16>
    %33 = vector.shape_cast %32 : vector<1x1x64x108xbf16> to vector<64x108xbf16>
    %cst_33 = arith.constant dense<0.000000e+00> : vector<64x128xf32>
    %34 = tpu.matmul %33, %0, %cst_33 {dimension_numbers = #tpu.dot_dimension_numbers<[1], [0], [0], [1], [0, 0, 1, 1], [], []>} : vector<64x108xbf16>, vector<108x128xbf16>, vector<64x128xf32> -> vector<64x128xf32>
    %35 = vector.broadcast %1 : vector<1x128xf32> to vector<64x128xf32>
    %36 = arith.addf %34, %35 : vector<64x128xf32>
    %cst_34 = arith.constant 0.000000e+00 : f32
    %37 = vector.broadcast %cst_34 : f32 to vector<64x128xf32>
    %38 = arith.maximumf %36, %37 : vector<64x128xf32>
    %c0_35 = arith.constant 0 : index
    %c3_36 = arith.constant 3 : index
    %c0_37 = arith.constant 0 : index
    %c0_38 = arith.constant 0 : index
    %39 = vector.load %arg5[%c0_35, %c3_36, %c0_37, %c0_38] : memref<1x8x64x128xf32, #tpu.memory_space<vmem>>, vector<1x1x64x128xf32>
    %40 = vector.shape_cast %39 : vector<1x1x64x128xf32> to vector<64x128xf32>
    %41 = vector.shape_cast %38 : vector<64x128xf32> to vector<1x1x64x128xf32>
    tpu.vector_store %arg5[%c0_35, %c3_36, %c0_37, %c0_38], %41 {strides = array<i32>} : memref<1x8x64x128xf32, #tpu.memory_space<vmem>>, vector<1x1x64x128xf32>,
    %c0_39 = arith.constant 0 : index
    %c4 = arith.constant 4 : index
    %c0_40 = arith.constant 0 : index
    %c0_41 = arith.constant 0 : index
    %42 = vector.load %arg2[%c0_39, %c4, %c0_40, %c0_41] : memref<1x8x64x108xbf16, #tpu.memory_space<vmem>>, vector<1x1x64x108xbf16>
    %43 = vector.shape_cast %42 : vector<1x1x64x108xbf16> to vector<64x108xbf16>
    %cst_42 = arith.constant dense<0.000000e+00> : vector<64x128xf32>
    %44 = tpu.matmul %43, %0, %cst_42 {dimension_numbers = #tpu.dot_dimension_numbers<[1], [0], [0], [1], [0, 0, 1, 1], [], []>} : vector<64x108xbf16>, vector<108x128xbf16>, vector<64x128xf32> -> vector<64x128xf32>
    %45 = vector.broadcast %1 : vector<1x128xf32> to vector<64x128xf32>
    %46 = arith.addf %44, %45 : vector<64x128xf32>
    %cst_43 = arith.constant 0.000000e+00 : f32
    %47 = vector.broadcast %cst_43 : f32 to vector<64x128xf32>
    %48 = arith.maximumf %46, %47 : vector<64x128xf32>
    %c0_44 = arith.constant 0 : index
    %c4_45 = arith.constant 4 : index
    %c0_46 = arith.constant 0 : index
    %c0_47 = arith.constant 0 : index
    %49 = vector.load %arg5[%c0_44, %c4_45, %c0_46, %c0_47] : memref<1x8x64x128xf32, #tpu.memory_space<vmem>>, vector<1x1x64x128xf32>
    %50 = vector.shape_cast %49 : vector<1x1x64x128xf32> to vector<64x128xf32>
    %51 = vector.shape_cast %48 : vector<64x128xf32> to vector<1x1x64x128xf32>
    tpu.vector_store %arg5[%c0_44, %c4_45, %c0_46, %c0_47], %51 {strides = array<i32>} : memref<1x8x64x128xf32, #tpu.memory_space<vmem>>, vector<1x1x64x128xf32>,
    %c0_48 = arith.constant 0 : index
    %c5 = arith.constant 5 : index
    %c0_49 = arith.constant 0 : index
    %c0_50 = arith.constant 0 : index
    %52 = vector.load %arg2[%c0_48, %c5, %c0_49, %c0_50] : memref<1x8x64x108xbf16, #tpu.memory_space<vmem>>, vector<1x1x64x108xbf16>
    %53 = vector.shape_cast %52 : vector<1x1x64x108xbf16> to vector<64x108xbf16>
    %cst_51 = arith.constant dense<0.000000e+00> : vector<64x128xf32>
    %54 = tpu.matmul %53, %0, %cst_51 {dimension_numbers = #tpu.dot_dimension_numbers<[1], [0], [0], [1], [0, 0, 1, 1], [], []>} : vector<64x108xbf16>, vector<108x128xbf16>, vector<64x128xf32> -> vector<64x128xf32>
    %55 = vector.broadcast %1 : vector<1x128xf32> to vector<64x128xf32>
    %56 = arith.addf %54, %55 : vector<64x128xf32>
    %cst_52 = arith.constant 0.000000e+00 : f32
    %57 = vector.broadcast %cst_52 : f32 to vector<64x128xf32>
    %58 = arith.maximumf %56, %57 : vector<64x128xf32>
    %c0_53 = arith.constant 0 : index
    %c5_54 = arith.constant 5 : index
    %c0_55 = arith.constant 0 : index
    %c0_56 = arith.constant 0 : index
    %59 = vector.load %arg5[%c0_53, %c5_54, %c0_55, %c0_56] : memref<1x8x64x128xf32, #tpu.memory_space<vmem>>, vector<1x1x64x128xf32>
    %60 = vector.shape_cast %59 : vector<1x1x64x128xf32> to vector<64x128xf32>
    %61 = vector.shape_cast %58 : vector<64x128xf32> to vector<1x1x64x128xf32>
    tpu.vector_store %arg5[%c0_53, %c5_54, %c0_55, %c0_56], %61 {strides = array<i32>} : memref<1x8x64x128xf32, #tpu.memory_space<vmem>>, vector<1x1x64x128xf32>,
    %c0_57 = arith.constant 0 : index
    %c6 = arith.constant 6 : index
    %c0_58 = arith.constant 0 : index
    %c0_59 = arith.constant 0 : index
    %62 = vector.load %arg2[%c0_57, %c6, %c0_58, %c0_59] : memref<1x8x64x108xbf16, #tpu.memory_space<vmem>>, vector<1x1x64x108xbf16>
    %63 = vector.shape_cast %62 : vector<1x1x64x108xbf16> to vector<64x108xbf16>
    %cst_60 = arith.constant dense<0.000000e+00> : vector<64x128xf32>
    %64 = tpu.matmul %63, %0, %cst_60 {dimension_numbers = #tpu.dot_dimension_numbers<[1], [0], [0], [1], [0, 0, 1, 1], [], []>} : vector<64x108xbf16>, vector<108x128xbf16>, vector<64x128xf32> -> vector<64x128xf32>
    %65 = vector.broadcast %1 : vector<1x128xf32> to vector<64x128xf32>
    %66 = arith.addf %64, %65 : vector<64x128xf32>
    %cst_61 = arith.constant 0.000000e+00 : f32
    %67 = vector.broadcast %cst_61 : f32 to vector<64x128xf32>
    %68 = arith.maximumf %66, %67 : vector<64x128xf32>
    %c0_62 = arith.constant 0 : index
    %c6_63 = arith.constant 6 : index
    %c0_64 = arith.constant 0 : index
    %c0_65 = arith.constant 0 : index
    %69 = vector.load %arg5[%c0_62, %c6_63, %c0_64, %c0_65] : memref<1x8x64x128xf32, #tpu.memory_space<vmem>>, vector<1x1x64x128xf32>
    %70 = vector.shape_cast %69 : vector<1x1x64x128xf32> to vector<64x128xf32>
    %71 = vector.shape_cast %68 : vector<64x128xf32> to vector<1x1x64x128xf32>
    tpu.vector_store %arg5[%c0_62, %c6_63, %c0_64, %c0_65], %71 {strides = array<i32>} : memref<1x8x64x128xf32, #tpu.memory_space<vmem>>, vector<1x1x64x128xf32>,
    %c0_66 = arith.constant 0 : index
    %c7 = arith.constant 7 : index
    %c0_67 = arith.constant 0 : index
    %c0_68 = arith.constant 0 : index
    %72 = vector.load %arg2[%c0_66, %c7, %c0_67, %c0_68] : memref<1x8x64x108xbf16, #tpu.memory_space<vmem>>, vector<1x1x64x108xbf16>
    %73 = vector.shape_cast %72 : vector<1x1x64x108xbf16> to vector<64x108xbf16>
    %cst_69 = arith.constant dense<0.000000e+00> : vector<64x128xf32>
    %74 = tpu.matmul %73, %0, %cst_69 {dimension_numbers = #tpu.dot_dimension_numbers<[1], [0], [0], [1], [0, 0, 1, 1], [], []>} : vector<64x108xbf16>, vector<108x128xbf16>, vector<64x128xf32> -> vector<64x128xf32>
    %75 = vector.broadcast %1 : vector<1x128xf32> to vector<64x128xf32>
    %76 = arith.addf %74, %75 : vector<64x128xf32>
    %cst_70 = arith.constant 0.000000e+00 : f32
    %77 = vector.broadcast %cst_70 : f32 to vector<64x128xf32>
    %78 = arith.maximumf %76, %77 : vector<64x128xf32>
    %c0_71 = arith.constant 0 : index
    %c7_72 = arith.constant 7 : index
    %c0_73 = arith.constant 0 : index
    %c0_74 = arith.constant 0 : index
    %79 = vector.load %arg5[%c0_71, %c7_72, %c0_73, %c0_74] : memref<1x8x64x128xf32, #tpu.memory_space<vmem>>, vector<1x1x64x128xf32>
    %80 = vector.shape_cast %79 : vector<1x1x64x128xf32> to vector<64x128xf32>
    %81 = vector.shape_cast %78 : vector<64x128xf32> to vector<1x1x64x128xf32>
    tpu.vector_store %arg5[%c0_71, %c7_72, %c0_73, %c0_74], %81 {strides = array<i32>} : memref<1x8x64x128xf32, #tpu.memory_space<vmem>>, vector<1x1x64x128xf32>,
    return
  }
  func.func @transform_0(%arg0: i32, %arg1: i32) -> (i32, i32, i32, i32) {
    %c0_i32 = arith.constant 0 : i32
    %c0_i32_0 = arith.constant 0 : i32
    %c0_i32_1 = arith.constant 0 : i32
    return %arg0, %arg1, %c0_i32, %c0_i32_0 : i32, i32, i32, i32
  }
  func.func @transform_1(%arg0: i32, %arg1: i32) -> (i32, i32) {
    %c0_i32 = arith.constant 0 : i32
    %c0_i32_0 = arith.constant 0 : i32
    %c0_i32_1 = arith.constant 0 : i32
    return %c0_i32, %c0_i32_0 : i32, i32
  }
  func.func @transform_2(%arg0: i32, %arg1: i32) -> (i32, i32) {
    %c0_i32 = arith.constant 0 : i32
    %c0_i32_0 = arith.constant 0 : i32
    %c0_i32_1 = arith.constant 0 : i32
    return %c0_i32, %c0_i32_0 : i32, i32
  }
  func.func @transform_3(%arg0: i32, %arg1: i32) -> (i32, i32, i32, i32) {
    %c0_i32 = arith.constant 0 : i32
    %c0_i32_0 = arith.constant 0 : i32
    %c0_i32_1 = arith.constant 0 : i32
    return %arg0, %arg1, %c0_i32, %c0_i32_0 : i32, i32, i32, i32
  }
}

</mosaic_0001>

<llo_original>
// kernel: tpu_custom_call.1
$region0: #{tpu_custom_call.1}
  #allocation0 [shape = 'u32[]', space=smem, size = 0x4, offset = 0x4, fixed_abs, tag = 'smem constant byte address 0x4 - core index']
  #allocation1 [shape = 'u32[144,128]{1,0:T(1,128)}', space=vmem, size = 0x12000, scoped, tag = 'internal scratch']
  %s0 = inlined_call_operand.hbm [shape: bf16[2,8,64,108], index: 0, kind: input, shape index: {}]
  %s1 = inlined_call_operand.hbm [shape: bf16[108,128], index: 1, kind: input, shape index: {}]
  %s2 = inlined_call_operand.vmem [shape: f32[1,128], index: 2, kind: input, shape index: {}]
  %s3 = inlined_call_operand.hbm [shape: f32[2,8,64,128], index: 3, kind: output, shape index: {}]
  %s4 = sld [smem:[#allocation0]]
  $region53: #{tpu_custom_call.1} parent=0
    _
  %s6 = ssub.s32 1, %s4
  %s7 = scalar_select 0, %s6, %s4
  $region1: #{tpu_custom_call.1} parent=0
    #allocation2 [shape = 'u8[262144]{0}', space=vmem, size = 0x40000, scoped, tag = 'input window, operand 0']
    #allocation3 [shape = 's32[2]{0}', space=sflag, size = 0x8, scoped, tag = 'scoped memory for tpu_custom_call.1']
    #allocation4 [shape = 's32[2]{0}', space=sflag, size = 0x8, scoped, tag = 'scoped memory for tpu_custom_call.1']
    #allocation5 [shape = 'u8[28672]{0}', space=vmem, size = 0x7000, scoped, tag = 'input window, operand 1, single buffered']
    #allocation6 [shape = 's32[1]{0}', space=sflag, size = 0x4, scoped, tag = 'scoped memory for tpu_custom_call.1']
    #allocation7 [shape = 'u8[524288]{0}', space=vmem, size = 0x80000, scoped, tag = 'output window, operand 0']
    %8 = vsyncpa [#allocation3], 0
    %s9 = scalar_lea.sflag [#allocation3], 1
    %10 = vsyncpa %s9, 0
    %11 = vsyncpa [#allocation6], 0
    %12 = vsyncpa [#allocation4], 0
    %s13 = scalar_lea.sflag [#allocation4], 1
    %14 = vsyncpa %s13, 0
    loop: start=0, step=1, limit=4
    $region2: #{tpu_custom_call.1} parent=1 // loop_pre_header
      _
    $region3: #{tpu_custom_call.1} parent=1 // loop_header
      %s16 = sphi 0, %s20
      %p17 = scmp.ge.s32.totalorder %s16, 4
      %s23 = sphi 0, %s35
      %s24 = sphi 0, %s31
      %s25 = sphi 0, %s23
      %s26 = sphi 0, %s24
      %s27 = sphi 0, %s25
      %s28 = sphi 0, %s26
      %s40 = sphi 0, %s42
      %s43 = sphi 0, %s40
      %s44 = sphi 0, %s43
      %s60 = sphi 0, %s44
      %s64 = sphi 0, %s64
      %s66 = sphi 0, %s64
      %s67 = sphi 0, %s66
      %s81 = sphi 0, %s67
      %s85 = sphi 0, %s85
      %s87 = sphi 0, %s85
      %s88 = sphi 0, %s87
      %s102 = sphi 0, %s88
      %s110 = sphi 0, %s112
      %s113 = sphi 0, %s110
      %s114 = sphi 0, %s113
      %s130 = sphi 0, %s114
    $region4: #{tpu_custom_call.1} parent=1 // loop_header_branch
      %19 = sbr.rel (%p17) target = $region8
    $region5: #{tpu_custom_call.1} parent=1 // loop_body
      %s21 = ssub.s32 %s16, 1
      %s22 = ssub.s32 %s16, 2
      %s29 = sadd.s32 1, %s24
      %p30 = scmp.ge.s32.totalorder %s29, 1
      %s31 = scalar_select %p30, 0, %s29
      %s32 = sadd.s32 1, %s23
      %s33 = scalar_select %p30, %s32, %s23
      %p34 = scmp.ge.s32.totalorder %s33, 2
      %s35 = scalar_select %p34, 0, %s33
      %s36 = ssub.s32 %s23, %s35
      %s37 = ssub.s32 %s24, %s31
      %s38 = sor.u32 %s36, %s37
      %p39 = scmp.eq.s32.totalorder %s38, 0
      %s41 = sadd.s32 %s40, 1
      %s42 = scalar_select %p39, %s40, %s41
      %p45 = pneg %p39
      %p46 = scmp.eq.s32.totalorder %s16, 1
      %p47 = por %p45, %p46
      %p48 = scmp.ne.s32.totalorder %s40, %s43
      %p49 = scmp.eq.s32.totalorder %s16, 0
      %p50 = por %p48, %p49
      %p51 = scmp.ne.s32.totalorder %s40, %s43
      %p52 = scmp.eq.s32.totalorder %s21, 1
      %p53 = por %p51, %p52
      %p54 = scmp.ne.s32.totalorder %s43, %s44
      %p55 = scmp.eq.s32.totalorder %s21, 0
      %p56 = por %p54, %p55
      %p57 = scmp.ne.s32.totalorder %s43, %s44
      %p58 = scmp.eq.s32.totalorder %s22, 1
      %p59 = por %p57, %p58
      %p61 = scmp.ne.s32.totalorder %s44, %s60
      %p62 = scmp.eq.s32.totalorder %s22, 0
      %p63 = por %p61, %p62
      %s65 = sadd.s32 %s64, 1
      %p68 = scmp.eq.s32.totalorder %s16, 1
      %p69 = scmp.ne.s32.totalorder %s64, %s66
      %p70 = scmp.eq.s32.totalorder %s16, 0
      %p71 = por %p69, %p70
      %p72 = scmp.ne.s32.totalorder %s64, %s66
      %p73 = scmp.eq.s32.totalorder %s21, 1
      %p74 = por %p72, %p73
      %p75 = scmp.ne.s32.totalorder %s66, %s67
      %p76 = scmp.eq.s32.totalorder %s21, 0
      %p77 = por %p75, %p76
      %p78 = scmp.ne.s32.totalorder %s66, %s67
      %p79 = scmp.eq.s32.totalorder %s22, 1
      %p80 = por %p78, %p79
      %p82 = scmp.ne.s32.totalorder %s67, %s81
      %p83 = scmp.eq.s32.totalorder %s22, 0
      %p84 = por %p82, %p83
      %s86 = sadd.s32 %s85, 1
      %p89 = scmp.eq.s32.totalorder %s16, 1
      %p90 = scmp.ne.s32.totalorder %s85, %s87
      %p91 = scmp.eq.s32.totalorder %s16, 0
      %p92 = por %p90, %p91
      %p93 = scmp.ne.s32.totalorder %s85, %s87
      %p94 = scmp.eq.s32.totalorder %s21, 1
      %p95 = por %p93, %p94
      %p96 = scmp.ne.s32.totalorder %s87, %s88
      %p97 = scmp.eq.s32.totalorder %s21, 0
      %p98 = por %p96, %p97
      %p99 = scmp.ne.s32.totalorder %s87, %s88
      %p100 = scmp.eq.s32.totalorder %s22, 1
      %p101 = por %p99, %p100
      %p103 = scmp.ne.s32.totalorder %s88, %s102
      %p104 = scmp.eq.s32.totalorder %s22, 0
      %p105 = por %p103, %p104
      %s106 = ssub.s32 %s23, %s35
      %s107 = ssub.s32 %s24, %s31
      %s108 = sor.u32 %s106, %s107
      %p109 = scmp.eq.s32.totalorder %s108, 0
      %s111 = sadd.s32 %s110, 1
      %s112 = scalar_select %p109, %s110, %s111
      %p115 = pneg %p109
      %p116 = scmp.eq.s32.totalorder %s16, 1
      %p117 = por %p115, %p116
      %p118 = scmp.ne.s32.totalorder %s110, %s113
      %p119 = scmp.eq.s32.totalorder %s16, 0
      %p120 = por %p118, %p119
      %p121 = scmp.ne.s32.totalorder %s110, %s113
      %p122 = scmp.eq.s32.totalorder %s21, 1
      %p123 = por %p121, %p122
      %p124 = scmp.ne.s32.totalorder %s113, %s114
      %p125 = scmp.eq.s32.totalorder %s21, 0
      %p126 = por %p124, %p125
      %p127 = scmp.ne.s32.totalorder %s113, %s114
      %p128 = scmp.eq.s32.totalorder %s22, 1
      %p129 = por %p127, %p128
      %p131 = scmp.ne.s32.totalorder %s114, %s130
      %p132 = scmp.eq.s32.totalorder %s22, 0
      %p133 = por %p131, %p132
      %p134 = scmp.le.s32.totalorder 1, %s16
      %p135 = scmp.lt.s32.totalorder %s16, 3
      %p136 = pnand %p134, %p135
      %p137 = pneg %p136
      // Predicated region
      $region9: #{tpu_custom_call.1} parent=5 // pred_check
        _
      $region10: #{tpu_custom_call.1} parent=5 // pred_check_branch
        %139 = sbr.rel (%p136) target = $region12
      $region11: #{tpu_custom_call.1} parent=5 // pred_region
        %s140 = ssub.s32 %s16, 1
        // Predicated region
        $region13: #{tpu_custom_call.1} parent=11 // pred_check
          %p141 = pneg %p77
        $region14: #{tpu_custom_call.1} parent=11 // pred_check_branch
          %143 = sbr.rel (%p141) target = $region16
        $region15: #{tpu_custom_call.1} parent=11 // pred_region
          %s145 = ssub.s32 896, 896
          %146 = vsyncadd [#allocation6], %s145
          %s147 = sshll.u32 [#allocation5], 4
          %s148 = int_to_ptr.vmem [resolvable:$true] %s147
          %153 = dma.hbm_to_vmem [thread:$0]  %s1, 896, %s148, [#allocation6], 64, 64, 4
        $region16: #{tpu_custom_call.1} parent=11 // pred_fallthru
          _
        // Predicated region
        $region17: #{tpu_custom_call.1} parent=11 // pred_check
          %p154 = pneg %p98
        $region18: #{tpu_custom_call.1} parent=11 // pred_check_branch
          %156 = sbr.rel (%p154) target = $region20
        $region19: #{tpu_custom_call.1} parent=11 // pred_region
          _
        $region20: #{tpu_custom_call.1} parent=11 // pred_fallthru
          _
      $region12: #{tpu_custom_call.1} parent=5 // pred_fallthru
        _
      %p157 = scmp.lt.s32.totalorder %s16, 2
      // Predicated region
      $region21: #{tpu_custom_call.1} parent=5 // pred_check
        %p158 = pneg %p157
      $region22: #{tpu_custom_call.1} parent=5 // pred_check_branch
        %160 = sbr.rel (%p158) target = $region24
      $region23: #{tpu_custom_call.1} parent=5 // pred_region
        // Predicated region
        $region25: #{tpu_custom_call.1} parent=23 // pred_check
          %p161 = pneg %p50
        $region26: #{tpu_custom_call.1} parent=23 // pred_check_branch
          %163 = sbr.rel (%p161) target = $region28
        $region27: #{tpu_custom_call.1} parent=23 // pred_region
          %s164 = sand.u32 %s40, 1
          %s165 = scalar_lea.sflag [#allocation3], %s164
          %s166 = sand.u32 %s40, 1
          %s167 = smul.addr %s166, 256
          %s168 = scalar_lea.vmem [#allocation2], %s167
          %s169 = smul.u32 8, %s24
          %s171 = ssub.s32 4096, 4096
          %172 = vsyncadd %s165, %s171
          %s173 = smul.addr %s169, 8
          %s174 = smul.addr %s23, 64
          %s175 = sadd.s32 %s173, %s174
          %s176 = smul.addr %s175, 64
          %s177 = scalar_lea.hbm %s0, %s176
          %s178 = sshll.u32 %s168, 4
          %s179 = int_to_ptr.vmem [resolvable:$true] %s178
          %184 = dma.hbm_to_vmem [thread:$0]  %s177, 4096, %s179, %s165, 64, 64, 4
        $region28: #{tpu_custom_call.1} parent=23 // pred_fallthru
          _
      $region24: #{tpu_custom_call.1} parent=5 // pred_fallthru
        _
      %p185 = scmp.le.s32.totalorder 1, %s16
      %p186 = scmp.lt.s32.totalorder %s16, 3
      %p187 = pnand %p185, %p186
      %p188 = pneg %p187
      // Predicated region
      $region29: #{tpu_custom_call.1} parent=5 // pred_check
        _
      $region30: #{tpu_custom_call.1} parent=5 // pred_check_branch
        %190 = sbr.rel (%p187) target = $region32
      $region31: #{tpu_custom_call.1} parent=5 // pred_region
        %s191 = ssub.s32 %s16, 1
        %s192 = sand.u32 %s43, 1
        %s193 = scalar_lea.sflag [#allocation3], %s192
        %s194 = sand.u32 %s43, 1
        %s195 = smul.addr %s194, 256
        %s196 = scalar_lea.vmem [#allocation2], %s195
        // Predicated region
        $region33: #{tpu_custom_call.1} parent=31 // pred_check
          %p197 = pneg %p56
        $region34: #{tpu_custom_call.1} parent=31 // pred_check_branch
          %199 = sbr.rel (%p197) target = $region36
        $region35: #{tpu_custom_call.1} parent=31 // pred_region
          %200 = dma.done %s193, 4096
        $region36: #{tpu_custom_call.1} parent=31 // pred_fallthru
          _
        // Predicated region
        $region37: #{tpu_custom_call.1} parent=31 // pred_check
          %p201 = pneg %p77
        $region38: #{tpu_custom_call.1} parent=31 // pred_check_branch
          %203 = sbr.rel (%p201) target = $region40
        $region39: #{tpu_custom_call.1} parent=31 // pred_region
          %204 = dma.done [#allocation6], 896
        $region40: #{tpu_custom_call.1} parent=31 // pred_fallthru
          _
        %s205 = sand.u32 %s43, 1
        %s206 = scalar_lea.sflag [#allocation3], %s205
        %s207 = sand.u32 %s43, 1
        %s208 = smul.addr %s207, 256
        %s209 = scalar_lea.vmem [#allocation2], %s208
        %p210 = pneg %p56
        %p211 = pneg %p53
        %p212 = pneg %p77
        %p213 = pneg %p74
        %p214 = pneg %p98
        %p215 = pneg %p95
        %p216 = pneg %p126
        %p217 = pneg %p123
        %s218 = sand.u32 %s113, 1
        %s219 = scalar_lea.sflag [#allocation4], %s218
        %s220 = sand.u32 %s113, 1
        %s221 = smul.addr %s220, 512
        %s222 = scalar_lea.vmem [#allocation7], %s221
        %s223 = smul.u32 8, %s26
        %s224 = smul.u32 8, %s26
        %v226 = vld [vmem:[#allocation5] sm:$0xf]
        %v227 = vld [vmem:[#allocation5 + $0x4] sm:$0xf]
        %v228 = vld [vmem:[#allocation5 + $0x8] sm:$0xf]
        %v229 = vld [vmem:[#allocation5 + $0xc] sm:$0xf]
        %v230 = vld [vmem:[#allocation5 + $0x10] sm:$0xf]
        %v231 = vld [vmem:[#allocation5 + $0x14] sm:$0xf]
        %v232 = vld [vmem:[#allocation5 + $0x18] sm:$0xf]
        %v233 = vld [vmem:[#allocation5 + $0x1c] sm:$0xf]
        %v234 = vld [vmem:[#allocation5 + $0x20] sm:$0xf]
        %v235 = vld [vmem:[#allocation5 + $0x24] sm:$0xf]
        %v236 = vld [vmem:[#allocation5 + $0x28] sm:$0xf]
        %v237 = vld [vmem:[#allocation5 + $0x2c] sm:$0xf]
        %v238 = vld [vmem:[#allocation5 + $0x30] sm:$0xf]
        %v239 = vld [vmem:[#allocation5 + $0x34] sm:$0x3]
        %v240 = vld [vmem:[%s2] sm:$0x1]
        %v241 = vld [vmem:[%s196] sm:$0xf]
        %v242 = vld [vmem:[%s196 + $0x4] sm:$0xf]
        %v243 = vld [vmem:[%s196 + $0x8] sm:$0xf]
        %v244 = vld [vmem:[%s196 + $0xc] sm:$0xf]
        %v245 = vld [vmem:[%s196 + $0x10] sm:$0xf]
        %v246 = vld [vmem:[%s196 + $0x14] sm:$0xf]
        %v247 = vld [vmem:[%s196 + $0x18] sm:$0xf]
        %v248 = vld [vmem:[%s196 + $0x1c] sm:$0xf]
        %v250 = vlaneseq
        %v251 = vshrl.u32 %v250, 7
        %v252 = vsub.s32 0, %v251
        %v253 = vrot.slane %v240, %v252
        %v263 = vunpack.c.l.b16 %v241
        %v264 = vunpack.c.l.b16 %v242
        %v265 = vunpack.c.l.b16 %v243
        %v266 = vunpack.c.l.b16 %v244
        %v267 = vunpack.c.l.b16 %v245
        %v268 = vunpack.c.l.b16 %v246
        %v269 = vunpack.c.l.b16 %v247
        %v270 = vunpack.c.l.b16 %v248
        %v271 = vpack.c.b16 %v264, %v263
        %v272 = vpack.c.b16 %v266, %v265
        %v273 = vpack.c.b16 %v268, %v267
        %v274 = vpack.c.b16 %v270, %v269
        %v289 = vunpack.c.l.b16 %v226
        %v290 = vunpack.c.l.b16 %v227
        %v291 = vunpack.c.l.b16 %v228
        %v292 = vunpack.c.l.b16 %v229
        %v293 = vunpack.c.l.b16 %v230
        %v294 = vunpack.c.l.b16 %v231
        %v295 = vunpack.c.l.b16 %v232
        %v296 = vunpack.c.l.b16 %v233
        %v297 = vunpack.c.l.b16 %v234
        %v298 = vunpack.c.l.b16 %v235
        %v299 = vunpack.c.l.b16 %v236
        %v300 = vunpack.c.l.b16 %v237
        %v301 = vunpack.c.l.b16 %v238
        %v302 = vunpack.c.l.b16 %v239
        %v303 = vpack.c.b16 %v290, %v289
        %v304 = vpack.c.b16 %v292, %v291
        %v305 = vpack.c.b16 %v294, %v293
        %v306 = vpack.c.b16 %v296, %v295
        %v307 = vpack.c.b16 %v298, %v297
        %v308 = vpack.c.b16 %v300, %v299
        %v309 = vpack.c.b16 %v302, %v301
        %vm316 = vcmask 883712
        %v318 = vsel %vm316, %v271, 0
        %v321 = vsel %vm316, %v272, 0
        %v324 = vsel %vm316, %v273, 0
        %v327 = vsel %vm316, %v274, 0
        %vm329 = vcmask 1045504
        %v331 = vsel %vm329, %v309, 0
        %333 = vmatprep.subr.bf16.mxu0 0
        %334 = vmatpush1.bf16.msra.mxu0 0
        %335 = vmatprep.subr.bf16.mxu0 0
        %336 = vmatpush1.bf16.msra.mxu0 %v331
        %337 = vmatprep.subr.bf16.mxu0 0
        %338 = vmatpush1.bf16.msra.mxu0 %v308
        %339 = vmatprep.subr.bf16.mxu0 0
        %340 = vmatpush1.bf16.msra.mxu0 %v307
        %341 = vmatprep.subr.bf16.mxu0 0
        %342 = vmatpush1.bf16.msra.mxu0 %v306
        %343 = vmatprep.subr.bf16.mxu0 0
        %344 = vmatpush1.bf16.msra.mxu0 %v305
        %345 = vmatprep.subr.bf16.mxu0 0
        %346 = vmatpush1.bf16.msra.mxu0 %v304
        %347 = vmatprep.subr.bf16.mxu0 0
        %348 = vmatpush1.bf16.msra.mxu0 %v303
        %349 = vmatprep.subr.bf16.mxu0 0
        %350 = vmatpush2.bf16.msra.mxu0 0
        %351 = vmatprep.subr.bf16.mxu0 0
        %352 = vmatpush2.bf16.msra.mxu0 0
        %353 = vmatprep.subr.bf16.mxu0 0
        %354 = vmatpush2.bf16.msra.mxu0 0
        %355 = vmatprep.subr.bf16.mxu0 0
        %356 = vmatpush2.bf16.msra.mxu0 0
        %357 = vmatprep.subr.bf16.mxu0 0
        %358 = vmatpush2.bf16.msra.mxu0 0
        %359 = vmatprep.subr.bf16.mxu0 0
        %360 = vmatpush2.bf16.msra.mxu0 0
        %361 = vmatprep.subr.bf16.mxu0 0
        %362 = vmatpush2.bf16.msra.mxu0 0
        %363 = vmatprep.subr.bf16.mxu0 0
        %364 = vmatpush2.bf16.msra.mxu0 0
        %365 = vmatprep.mubr.bf16.mxu0 0
        %366 = vmatmul.mubr.bf16.gmra.mxu0 %v318
        %v367 = vpop.f32.mrf.mxu0
        %v368 = vadd.f32 %v253, %v367
        %v369 = vpop.f32.mrf.mxu0
        %v370 = vpop.f32.mrf.mxu0
        %v371 = vadd.f32 %v253, %v370
        %v372 = vpop.f32.mrf.mxu0
        %373 = vmatprep.mubr.bf16.mxu0 0
        %374 = vmatmul.mubr.bf16.gmra.mxu0 %v321
        %v375 = vpop.f32.mrf.mxu0
        %v376 = vadd.f32 %v253, %v375
        %v377 = vpop.f32.mrf.mxu0
        %v378 = vpop.f32.mrf.mxu0
        %v379 = vadd.f32 %v253, %v378
        %v380 = vpop.f32.mrf.mxu0
        %381 = vmatprep.mubr.bf16.mxu0 0
        %382 = vmatmul.mubr.bf16.gmra.mxu0 %v324
        %v383 = vpop.f32.mrf.mxu0
        %v384 = vadd.f32 %v253, %v383
        %v385 = vpop.f32.mrf.mxu0
        %v386 = vpop.f32.mrf.mxu0
        %v387 = vadd.f32 %v253, %v386
        %v388 = vpop.f32.mrf.mxu0
        %389 = vmatprep.mubr.bf16.mxu0 0
        %390 = vmatmul.mubr.bf16.gmra.mxu0 %v327
        %v391 = vpop.f32.mrf.mxu0
        %v392 = vadd.f32 %v253, %v391
        %v393 = vpop.f32.mrf.mxu0
        %v394 = vpop.f32.mrf.mxu0
        %v395 = vadd.f32 %v253, %v394
        %v396 = vpop.f32.mrf.mxu0
        %397 = vdwg.mxu0
        %v398 = vmax.f32 %v368, 0.0
        %v399 = vmax.f32 %v371, 0.0
        %v400 = vmax.f32 %v376, 0.0
        %v401 = vmax.f32 %v379, 0.0
        %v402 = vmax.f32 %v384, 0.0
        %v403 = vmax.f32 %v387, 0.0
        %v404 = vmax.f32 %v392, 0.0
        %v405 = vmax.f32 %v395, 0.0
        %406 = vst [vmem:[%s222] sm:$0xff] %v398
        %407 = vst [vmem:[%s222 + $0x8] sm:$0xff] %v399
        %408 = vst [vmem:[%s222 + $0x10] sm:$0xff] %v400
        %409 = vst [vmem:[%s222 + $0x18] sm:$0xff] %v401
        %410 = vst [vmem:[%s222 + $0x20] sm:$0xff] %v402
        %411 = vst [vmem:[%s222 + $0x28] sm:$0xff] %v403
        %412 = vst [vmem:[%s222 + $0x30] sm:$0xff] %v404
        %413 = vst [vmem:[%s222 + $0x38] sm:$0xff] %v405
        %s414 = scalar_lea.vmem %s196, 32 [#allocation2]
        %v415 = vld [vmem:[%s414] sm:$0xf]
        %v416 = vld [vmem:[%s414 + $0x4] sm:$0xf]
        %v417 = vld [vmem:[%s414 + $0x8] sm:$0xf]
        %v418 = vld [vmem:[%s414 + $0xc] sm:$0xf]
        %v419 = vld [vmem:[%s414 + $0x10] sm:$0xf]
        %v420 = vld [vmem:[%s414 + $0x14] sm:$0xf]
        %v421 = vld [vmem:[%s414 + $0x18] sm:$0xf]
        %v422 = vld [vmem:[%s414 + $0x1c] sm:$0xf]
        %v431 = vunpack.c.l.b16 %v415
        %v432 = vunpack.c.l.b16 %v416
        %v433 = vunpack.c.l.b16 %v417
        %v434 = vunpack.c.l.b16 %v418
        %v435 = vunpack.c.l.b16 %v419
        %v436 = vunpack.c.l.b16 %v420
        %v437 = vunpack.c.l.b16 %v421
        %v438 = vunpack.c.l.b16 %v422
        %v439 = vpack.c.b16 %v432, %v431
        %v440 = vpack.c.b16 %v434, %v433
        %v441 = vpack.c.b16 %v436, %v435
        %v442 = vpack.c.b16 %v438, %v437
        %v444 = vsel %vm316, %v439, 0
        %v447 = vsel %vm316, %v440, 0
        %v450 = vsel %vm316, %v441, 0
        %v453 = vsel %vm316, %v442, 0
        %455 = vmatprep.subr.bf16.mxu0 0
        %456 = vmatpush1.bf16.msra.mxu0 0
        %457 = vmatprep.subr.bf16.mxu0 0
        %458 = vmatpush1.bf16.msra.mxu0 %v331
        %459 = vmatprep.subr.bf16.mxu0 0
        %460 = vmatpush1.bf16.msra.mxu0 %v308
        %461 = vmatprep.subr.bf16.mxu0 0
        %462 = vmatpush1.bf16.msra.mxu0 %v307
        %463 = vmatprep.subr.bf16.mxu0 0
        %464 = vmatpush1.bf16.msra.mxu0 %v306
        %465 = vmatprep.subr.bf16.mxu0 0
        %466 = vmatpush1.bf16.msra.mxu0 %v305
        %467 = vmatprep.subr.bf16.mxu0 0
        %468 = vmatpush1.bf16.msra.mxu0 %v304
        %469 = vmatprep.subr.bf16.mxu0 0
        %470 = vmatpush1.bf16.msra.mxu0 %v303
        %471 = vmatprep.subr.bf16.mxu0 0
        %472 = vmatpush2.bf16.msra.mxu0 0
        %473 = vmatprep.subr.bf16.mxu0 0
        %474 = vmatpush2.bf16.msra.mxu0 0
        %475 = vmatprep.subr.bf16.mxu0 0
        %476 = vmatpush2.bf16.msra.mxu0 0
        %477 = vmatprep.subr.bf16.mxu0 0
        %478 = vmatpush2.bf16.msra.mxu0 0
        %479 = vmatprep.subr.bf16.mxu0 0
        %480 = vmatpush2.bf16.msra.mxu0 0
        %481 = vmatprep.subr.bf16.mxu0 0
        %482 = vmatpush2.bf16.msra.mxu0 0
        %483 = vmatprep.subr.bf16.mxu0 0
        %484 = vmatpush2.bf16.msra.mxu0 0
        %485 = vmatprep.subr.bf16.mxu0 0
        %486 = vmatpush2.bf16.msra.mxu0 0
        %487 = vmatprep.mubr.bf16.mxu0 0
        %488 = vmatmul.mubr.bf16.gmra.mxu0 %v444
        %v489 = vpop.f32.mrf.mxu0
        %v490 = vadd.f32 %v253, %v489
        %v491 = vpop.f32.mrf.mxu0
        %v492 = vpop.f32.mrf.mxu0
        %v493 = vadd.f32 %v253, %v492
        %v494 = vpop.f32.mrf.mxu0
        %495 = vmatprep.mubr.bf16.mxu0 0
        %496 = vmatmul.mubr.bf16.gmra.mxu0 %v447
        %v497 = vpop.f32.mrf.mxu0
        %v498 = vadd.f32 %v253, %v497
        %v499 = vpop.f32.mrf.mxu0
        %v500 = vpop.f32.mrf.mxu0
        %v501 = vadd.f32 %v253, %v500
        %v502 = vpop.f32.mrf.mxu0
        %503 = vmatprep.mubr.bf16.mxu0 0
        %504 = vmatmul.mubr.bf16.gmra.mxu0 %v450
        %v505 = vpop.f32.mrf.mxu0
        %v506 = vadd.f32 %v253, %v505
        %v507 = vpop.f32.mrf.mxu0
        %v508 = vpop.f32.mrf.mxu0
        %v509 = vadd.f32 %v253, %v508
        %v510 = vpop.f32.mrf.mxu0
        %511 = vmatprep.mubr.bf16.mxu0 0
        %512 = vmatmul.mubr.bf16.gmra.mxu0 %v453
        %v513 = vpop.f32.mrf.mxu0
        %v514 = vadd.f32 %v253, %v513
        %v515 = vpop.f32.mrf.mxu0
        %v516 = vpop.f32.mrf.mxu0
        %v517 = vadd.f32 %v253, %v516
        %v518 = vpop.f32.mrf.mxu0
        %519 = vdwg.mxu0
        %v520 = vmax.f32 %v490, 0.0
        %v521 = vmax.f32 %v493, 0.0
        %v522 = vmax.f32 %v498, 0.0
        %v523 = vmax.f32 %v501, 0.0
        %v524 = vmax.f32 %v506, 0.0
        %v525 = vmax.f32 %v509, 0.0
        %v526 = vmax.f32 %v514, 0.0
        %v527 = vmax.f32 %v517, 0.0
        %s528 = scalar_lea.vmem %s222, 64 [#allocation7]
        %529 = vst [vmem:[%s528] sm:$0xff] %v520
        %530 = vst [vmem:[%s528 + $0x8] sm:$0xff] %v521
        %531 = vst [vmem:[%s528 + $0x10] sm:$0xff] %v522
        %532 = vst [vmem:[%s528 + $0x18] sm:$0xff] %v523
        %533 = vst [vmem:[%s528 + $0x20] sm:$0xff] %v524
        %534 = vst [vmem:[%s528 + $0x28] sm:$0xff] %v525
        %535 = vst [vmem:[%s528 + $0x30] sm:$0xff] %v526
        %536 = vst [vmem:[%s528 + $0x38] sm:$0xff] %v527
        %s537 = scalar_lea.vmem %s196, 64 [#allocation2]
        %v538 = vld [vmem:[%s537] sm:$0xf]
        %v539 = vld [vmem:[%s537 + $0x4] sm:$0xf]
        %v540 = vld [vmem:[%s537 + $0x8] sm:$0xf]
        %v541 = vld [vmem:[%s537 + $0xc] sm:$0xf]
        %v542 = vld [vmem:[%s537 + $0x10] sm:$0xf]
        %v543 = vld [vmem:[%s537 + $0x14] sm:$0xf]
        %v544 = vld [vmem:[%s537 + $0x18] sm:$0xf]
        %v545 = vld [vmem:[%s537 + $0x1c] sm:$0xf]
        %v554 = vunpack.c.l.b16 %v538
        %v555 = vunpack.c.l.b16 %v539
        %v556 = vunpack.c.l.b16 %v540
        %v557 = vunpack.c.l.b16 %v541
        %v558 = vunpack.c.l.b16 %v542
        %v559 = vunpack.c.l.b16 %v543
        %v560 = vunpack.c.l.b16 %v544
        %v561 = vunpack.c.l.b16 %v545
        %v562 = vpack.c.b16 %v555, %v554
        %v563 = vpack.c.b16 %v557, %v556
        %v564 = vpack.c.b16 %v559, %v558
        %v565 = vpack.c.b16 %v561, %v560
        %v567 = vsel %vm316, %v562, 0
        %v570 = vsel %vm316, %v563, 0
        %v573 = vsel %vm316, %v564, 0
        %v576 = vsel %vm316, %v565, 0
        %578 = vmatprep.subr.bf16.mxu0 0
        %579 = vmatpush1.bf16.msra.mxu0 0
        %580 = vmatprep.subr.bf16.mxu0 0
        %581 = vmatpush1.bf16.msra.mxu0 %v331
        %582 = vmatprep.subr.bf16.mxu0 0
        %583 = vmatpush1.bf16.msra.mxu0 %v308
        %584 = vmatprep.subr.bf16.mxu0 0
        %585 = vmatpush1.bf16.msra.mxu0 %v307
        %586 = vmatprep.subr.bf16.mxu0 0
        %587 = vmatpush1.bf16.msra.mxu0 %v306
        %588 = vmatprep.subr.bf16.mxu0 0
        %589 = vmatpush1.bf16.msra.mxu0 %v305
        %590 = vmatprep.subr.bf16.mxu0 0
        %591 = vmatpush1.bf16.msra.mxu0 %v304
        %592 = vmatprep.subr.bf16.mxu0 0
        %593 = vmatpush1.bf16.msra.mxu0 %v303
        %594 = vmatprep.subr.bf16.mxu0 0
        %595 = vmatpush2.bf16.msra.mxu0 0
        %596 = vmatprep.subr.bf16.mxu0 0
        %597 = vmatpush2.bf16.msra.mxu0 0
        %598 = vmatprep.subr.bf16.mxu0 0
        %599 = vmatpush2.bf16.msra.mxu0 0
        %600 = vmatprep.subr.bf16.mxu0 0
        %601 = vmatpush2.bf16.msra.mxu0 0
        %602 = vmatprep.subr.bf16.mxu0 0
        %603 = vmatpush2.bf16.msra.mxu0 0
        %604 = vmatprep.subr.bf16.mxu0 0
        %605 = vmatpush2.bf16.msra.mxu0 0
        %606 = vmatprep.subr.bf16.mxu0 0
        %607 = vmatpush2.bf16.msra.mxu0 0
        %608 = vmatprep.subr.bf16.mxu0 0
        %609 = vmatpush2.bf16.msra.mxu0 0
        %610 = vmatprep.mubr.bf16.mxu0 0
        %611 = vmatmul.mubr.bf16.gmra.mxu0 %v567
        %v612 = vpop.f32.mrf.mxu0
        %v613 = vadd.f32 %v253, %v612
        %v614 = vpop.f32.mrf.mxu0
        %v615 = vpop.f32.mrf.mxu0
        %v616 = vadd.f32 %v253, %v615
        %v617 = vpop.f32.mrf.mxu0
        %618 = vmatprep.mubr.bf16.mxu0 0
        %619 = vmatmul.mubr.bf16.gmra.mxu0 %v570
        %v620 = vpop.f32.mrf.mxu0
        %v621 = vadd.f32 %v253, %v620
        %v622 = vpop.f32.mrf.mxu0
        %v623 = vpop.f32.mrf.mxu0
        %v624 = vadd.f32 %v253, %v623
        %v625 = vpop.f32.mrf.mxu0
        %626 = vmatprep.mubr.bf16.mxu0 0
        %627 = vmatmul.mubr.bf16.gmra.mxu0 %v573
        %v628 = vpop.f32.mrf.mxu0
        %v629 = vadd.f32 %v253, %v628
        %v630 = vpop.f32.mrf.mxu0
        %v631 = vpop.f32.mrf.mxu0
        %v632 = vadd.f32 %v253, %v631
        %v633 = vpop.f32.mrf.mxu0
        %634 = vmatprep.mubr.bf16.mxu0 0
        %635 = vmatmul.mubr.bf16.gmra.mxu0 %v576
        %v636 = vpop.f32.mrf.mxu0
        %v637 = vadd.f32 %v253, %v636
        %v638 = vpop.f32.mrf.mxu0
        %v639 = vpop.f32.mrf.mxu0
        %v640 = vadd.f32 %v253, %v639
        %v641 = vpop.f32.mrf.mxu0
        %642 = vdwg.mxu0
        %v643 = vmax.f32 %v613, 0.0
        %v644 = vmax.f32 %v616, 0.0
        %v645 = vmax.f32 %v621, 0.0
        %v646 = vmax.f32 %v624, 0.0
        %v647 = vmax.f32 %v629, 0.0
        %v648 = vmax.f32 %v632, 0.0
        %v649 = vmax.f32 %v637, 0.0
        %v650 = vmax.f32 %v640, 0.0
        %s651 = scalar_lea.vmem %s222, 128 [#allocation7]
        %652 = vst [vmem:[%s651] sm:$0xff] %v643
        %653 = vst [vmem:[%s651 + $0x8] sm:$0xff] %v644
        %654 = vst [vmem:[%s651 + $0x10] sm:$0xff] %v645
        %655 = vst [vmem:[%s651 + $0x18] sm:$0xff] %v646
        %656 = vst [vmem:[%s651 + $0x20] sm:$0xff] %v647
        %657 = vst [vmem:[%s651 + $0x28] sm:$0xff] %v648
        %658 = vst [vmem:[%s651 + $0x30] sm:$0xff] %v649
        %659 = vst [vmem:[%s651 + $0x38] sm:$0xff] %v650
        %s660 = scalar_lea.vmem %s196, 96 [#allocation2]
        %v661 = vld [vmem:[%s660] sm:$0xf]
        %v662 = vld [vmem:[%s660 + $0x4] sm:$0xf]
        %v663 = vld [vmem:[%s660 + $0x8] sm:$0xf]
        %v664 = vld [vmem:[%s660 + $0xc] sm:$0xf]
        %v665 = vld [vmem:[%s660 + $0x10] sm:$0xf]
        %v666 = vld [vmem:[%s660 + $0x14] sm:$0xf]
        %v667 = vld [vmem:[%s660 + $0x18] sm:$0xf]
        %v668 = vld [vmem:[%s660 + $0x1c] sm:$0xf]
        %v677 = vunpack.c.l.b16 %v661
        %v678 = vunpack.c.l.b16 %v662
        %v679 = vunpack.c.l.b16 %v663
        %v680 = vunpack.c.l.b16 %v664
        %v681 = vunpack.c.l.b16 %v665
        %v682 = vunpack.c.l.b16 %v666
        %v683 = vunpack.c.l.b16 %v667
        %v684 = vunpack.c.l.b16 %v668
        %v685 = vpack.c.b16 %v678, %v677
        %v686 = vpack.c.b16 %v680, %v679
        %v687 = vpack.c.b16 %v682, %v681
        %v688 = vpack.c.b16 %v684, %v683
        %v690 = vsel %vm316, %v685, 0
        %v693 = vsel %vm316, %v686, 0
        %v696 = vsel %vm316, %v687, 0
        %v699 = vsel %vm316, %v688, 0
        %701 = vmatprep.subr.bf16.mxu0 0
        %702 = vmatpush1.bf16.msra.mxu0 0
        %703 = vmatprep.subr.bf16.mxu0 0
        %704 = vmatpush1.bf16.msra.mxu0 %v331
        %705 = vmatprep.subr.bf16.mxu0 0
        %706 = vmatpush1.bf16.msra.mxu0 %v308
        %707 = vmatprep.subr.bf16.mxu0 0
        %708 = vmatpush1.bf16.msra.mxu0 %v307
        %709 = vmatprep.subr.bf16.mxu0 0
        %710 = vmatpush1.bf16.msra.mxu0 %v306
        %711 = vmatprep.subr.bf16.mxu0 0
        %712 = vmatpush1.bf16.msra.mxu0 %v305
        %713 = vmatprep.subr.bf16.mxu0 0
        %714 = vmatpush1.bf16.msra.mxu0 %v304
        %715 = vmatprep.subr.bf16.mxu0 0
        %716 = vmatpush1.bf16.msra.mxu0 %v303
        %717 = vmatprep.subr.bf16.mxu0 0
        %718 = vmatpush2.bf16.msra.mxu0 0
        %719 = vmatprep.subr.bf16.mxu0 0
        %720 = vmatpush2.bf16.msra.mxu0 0
        %721 = vmatprep.subr.bf16.mxu0 0
        %722 = vmatpush2.bf16.msra.mxu0 0
        %723 = vmatprep.subr.bf16.mxu0 0
        %724 = vmatpush2.bf16.msra.mxu0 0
        %725 = vmatprep.subr.bf16.mxu0 0
        %726 = vmatpush2.bf16.msra.mxu0 0
        %727 = vmatprep.subr.bf16.mxu0 0
        %728 = vmatpush2.bf16.msra.mxu0 0
        %729 = vmatprep.subr.bf16.mxu0 0
        %730 = vmatpush2.bf16.msra.mxu0 0
        %731 = vmatprep.subr.bf16.mxu0 0
        %732 = vmatpush2.bf16.msra.mxu0 0
        %733 = vmatprep.mubr.bf16.mxu0 0
        %734 = vmatmul.mubr.bf16.gmra.mxu0 %v690
        %v735 = vpop.f32.mrf.mxu0
        %v736 = vadd.f32 %v253, %v735
        %v737 = vpop.f32.mrf.mxu0
        %v738 = vpop.f32.mrf.mxu0
        %v739 = vadd.f32 %v253, %v738
        %v740 = vpop.f32.mrf.mxu0
        %741 = vmatprep.mubr.bf16.mxu0 0
        %742 = vmatmul.mubr.bf16.gmra.mxu0 %v693
        %v743 = vpop.f32.mrf.mxu0
        %v744 = vadd.f32 %v253, %v743
        %v745 = vpop.f32.mrf.mxu0
        %v746 = vpop.f32.mrf.mxu0
        %v747 = vadd.f32 %v253, %v746
        %v748 = vpop.f32.mrf.mxu0
        %749 = vmatprep.mubr.bf16.mxu0 0
        %750 = vmatmul.mubr.bf16.gmra.mxu0 %v696
        %v751 = vpop.f32.mrf.mxu0
        %v752 = vadd.f32 %v253, %v751
        %v753 = vpop.f32.mrf.mxu0
        %v754 = vpop.f32.mrf.mxu0
        %v755 = vadd.f32 %v253, %v754
        %v756 = vpop.f32.mrf.mxu0
        %757 = vmatprep.mubr.bf16.mxu0 0
        %758 = vmatmul.mubr.bf16.gmra.mxu0 %v699
        %v759 = vpop.f32.mrf.mxu0
        %v760 = vadd.f32 %v253, %v759
        %v761 = vpop.f32.mrf.mxu0
        %v762 = vpop.f32.mrf.mxu0
        %v763 = vadd.f32 %v253, %v762
        %v764 = vpop.f32.mrf.mxu0
        %765 = vdwg.mxu0
        %v766 = vmax.f32 %v736, 0.0
        %v767 = vmax.f32 %v739, 0.0
        %v768 = vmax.f32 %v744, 0.0
        %v769 = vmax.f32 %v747, 0.0
        %v770 = vmax.f32 %v752, 0.0
        %v771 = vmax.f32 %v755, 0.0
        %v772 = vmax.f32 %v760, 0.0
        %v773 = vmax.f32 %v763, 0.0
        %s774 = scalar_lea.vmem %s222, 192 [#allocation7]
        %775 = vst [vmem:[%s774] sm:$0xff] %v766
        %776 = vst [vmem:[%s774 + $0x8] sm:$0xff] %v767
        %777 = vst [vmem:[%s774 + $0x10] sm:$0xff] %v768
        %778 = vst [vmem:[%s774 + $0x18] sm:$0xff] %v769
        %779 = vst [vmem:[%s774 + $0x20] sm:$0xff] %v770
        %780 = vst [vmem:[%s774 + $0x28] sm:$0xff] %v771
        %781 = vst [vmem:[%s774 + $0x30] sm:$0xff] %v772
        %782 = vst [vmem:[%s774 + $0x38] sm:$0xff] %v773
        %s783 = scalar_lea.vmem %s196, 128 [#allocation2]
        %v784 = vld [vmem:[%s783] sm:$0xf]
        %v785 = vld [vmem:[%s783 + $0x4] sm:$0xf]
        %v786 = vld [vmem:[%s783 + $0x8] sm:$0xf]
        %v787 = vld [vmem:[%s783 + $0xc] sm:$0xf]
        %v788 = vld [vmem:[%s783 + $0x10] sm:$0xf]
        %v789 = vld [vmem:[%s783 + $0x14] sm:$0xf]
        %v790 = vld [vmem:[%s783 + $0x18] sm:$0xf]
        %v791 = vld [vmem:[%s783 + $0x1c] sm:$0xf]
        %v800 = vunpack.c.l.b16 %v784
        %v801 = vunpack.c.l.b16 %v785
        %v802 = vunpack.c.l.b16 %v786
        %v803 = vunpack.c.l.b16 %v787
        %v804 = vunpack.c.l.b16 %v788
        %v805 = vunpack.c.l.b16 %v789
        %v806 = vunpack.c.l.b16 %v790
        %v807 = vunpack.c.l.b16 %v791
        %v808 = vpack.c.b16 %v801, %v800
        %v809 = vpack.c.b16 %v803, %v802
        %v810 = vpack.c.b16 %v805, %v804
        %v811 = vpack.c.b16 %v807, %v806
        %v813 = vsel %vm316, %v808, 0
        %v816 = vsel %vm316, %v809, 0
        %v819 = vsel %vm316, %v810, 0
        %v822 = vsel %vm316, %v811, 0
        %824 = vmatprep.subr.bf16.mxu0 0
        %825 = vmatpush1.bf16.msra.mxu0 0
        %826 = vmatprep.subr.bf16.mxu0 0
        %827 = vmatpush1.bf16.msra.mxu0 %v331
        %828 = vmatprep.subr.bf16.mxu0 0
        %829 = vmatpush1.bf16.msra.mxu0 %v308
        %830 = vmatprep.subr.bf16.mxu0 0
        %831 = vmatpush1.bf16.msra.mxu0 %v307
        %832 = vmatprep.subr.bf16.mxu0 0
        %833 = vmatpush1.bf16.msra.mxu0 %v306
        %834 = vmatprep.subr.bf16.mxu0 0
        %835 = vmatpush1.bf16.msra.mxu0 %v305
        %836 = vmatprep.subr.bf16.mxu0 0
        %837 = vmatpush1.bf16.msra.mxu0 %v304
        %838 = vmatprep.subr.bf16.mxu0 0
        %839 = vmatpush1.bf16.msra.mxu0 %v303
        %840 = vmatprep.subr.bf16.mxu0 0
        %841 = vmatpush2.bf16.msra.mxu0 0
        %842 = vmatprep.subr.bf16.mxu0 0
        %843 = vmatpush2.bf16.msra.mxu0 0
        %844 = vmatprep.subr.bf16.mxu0 0
        %845 = vmatpush2.bf16.msra.mxu0 0
        %846 = vmatprep.subr.bf16.mxu0 0
        %847 = vmatpush2.bf16.msra.mxu0 0
        %848 = vmatprep.subr.bf16.mxu0 0
        %849 = vmatpush2.bf16.msra.mxu0 0
        %850 = vmatprep.subr.bf16.mxu0 0
        %851 = vmatpush2.bf16.msra.mxu0 0
        %852 = vmatprep.subr.bf16.mxu0 0
        %853 = vmatpush2.bf16.msra.mxu0 0
        %854 = vmatprep.subr.bf16.mxu0 0
        %855 = vmatpush2.bf16.msra.mxu0 0
        %856 = vmatprep.mubr.bf16.mxu0 0
        %857 = vmatmul.mubr.bf16.gmra.mxu0 %v813
        %v858 = vpop.f32.mrf.mxu0
        %v859 = vadd.f32 %v253, %v858
        %v860 = vpop.f32.mrf.mxu0
        %v861 = vpop.f32.mrf.mxu0
        %v862 = vadd.f32 %v253, %v861
        %v863 = vpop.f32.mrf.mxu0
        %864 = vmatprep.mubr.bf16.mxu0 0
        %865 = vmatmul.mubr.bf16.gmra.mxu0 %v816
        %v866 = vpop.f32.mrf.mxu0
        %v867 = vadd.f32 %v253, %v866
        %v868 = vpop.f32.mrf.mxu0
        %v869 = vpop.f32.mrf.mxu0
        %v870 = vadd.f32 %v253, %v869
        %v871 = vpop.f32.mrf.mxu0
        %872 = vmatprep.mubr.bf16.mxu0 0
        %873 = vmatmul.mubr.bf16.gmra.mxu0 %v819
        %v874 = vpop.f32.mrf.mxu0
        %v875 = vadd.f32 %v253, %v874
        %v876 = vpop.f32.mrf.mxu0
        %v877 = vpop.f32.mrf.mxu0
        %v878 = vadd.f32 %v253, %v877
        %v879 = vpop.f32.mrf.mxu0
        %880 = vmatprep.mubr.bf16.mxu0 0
        %881 = vmatmul.mubr.bf16.gmra.mxu0 %v822
        %v882 = vpop.f32.mrf.mxu0
        %v883 = vadd.f32 %v253, %v882
        %v884 = vpop.f32.mrf.mxu0
        %v885 = vpop.f32.mrf.mxu0
        %v886 = vadd.f32 %v253, %v885
        %v887 = vpop.f32.mrf.mxu0
        %888 = vdwg.mxu0
        %v889 = vmax.f32 %v859, 0.0
        %v890 = vmax.f32 %v862, 0.0
        %v891 = vmax.f32 %v867, 0.0
        %v892 = vmax.f32 %v870, 0.0
        %v893 = vmax.f32 %v875, 0.0
        %v894 = vmax.f32 %v878, 0.0
        %v895 = vmax.f32 %v883, 0.0
        %v896 = vmax.f32 %v886, 0.0
        %s897 = scalar_lea.vmem %s222, 256 [#allocation7]
        %898 = vst [vmem:[%s897] sm:$0xff] %v889
        %899 = vst [vmem:[%s897 + $0x8] sm:$0xff] %v890
        %900 = vst [vmem:[%s897 + $0x10] sm:$0xff] %v891
        %901 = vst [vmem:[%s897 + $0x18] sm:$0xff] %v892
        %902 = vst [vmem:[%s897 + $0x20] sm:$0xff] %v893
        %903 = vst [vmem:[%s897 + $0x28] sm:$0xff] %v894
        %904 = vst [vmem:[%s897 + $0x30] sm:$0xff] %v895
        %905 = vst [vmem:[%s897 + $0x38] sm:$0xff] %v896
        %s906 = scalar_lea.vmem %s196, 160 [#allocation2]
        %v907 = vld [vmem:[%s906] sm:$0xf]
        %v908 = vld [vmem:[%s906 + $0x4] sm:$0xf]
        %v909 = vld [vmem:[%s906 + $0x8] sm:$0xf]
        %v910 = vld [vmem:[%s906 + $0xc] sm:$0xf]
        %v911 = vld [vmem:[%s906 + $0x10] sm:$0xf]
        %v912 = vld [vmem:[%s906 + $0x14] sm:$0xf]
        %v913 = vld [vmem:[%s906 + $0x18] sm:$0xf]
        %v914 = vld [vmem:[%s906 + $0x1c] sm:$0xf]
        %v923 = vunpack.c.l.b16 %v907
        %v924 = vunpack.c.l.b16 %v908
        %v925 = vunpack.c.l.b16 %v909
        %v926 = vunpack.c.l.b16 %v910
        %v927 = vunpack.c.l.b16 %v911
        %v928 = vunpack.c.l.b16 %v912
        %v929 = vunpack.c.l.b16 %v913
        %v930 = vunpack.c.l.b16 %v914
        %v931 = vpack.c.b16 %v924, %v923
        %v932 = vpack.c.b16 %v926, %v925
        %v933 = vpack.c.b16 %v928, %v927
        %v934 = vpack.c.b16 %v930, %v929
        %v936 = vsel %vm316, %v931, 0
        %v939 = vsel %vm316, %v932, 0
        %v942 = vsel %vm316, %v933, 0
        %v945 = vsel %vm316, %v934, 0
        %947 = vmatprep.subr.bf16.mxu0 0
        %948 = vmatpush1.bf16.msra.mxu0 0
        %949 = vmatprep.subr.bf16.mxu0 0
        %950 = vmatpush1.bf16.msra.mxu0 %v331
        %951 = vmatprep.subr.bf16.mxu0 0
        %952 = vmatpush1.bf16.msra.mxu0 %v308
        %953 = vmatprep.subr.bf16.mxu0 0
        %954 = vmatpush1.bf16.msra.mxu0 %v307
        %955 = vmatprep.subr.bf16.mxu0 0
        %956 = vmatpush1.bf16.msra.mxu0 %v306
        %957 = vmatprep.subr.bf16.mxu0 0
        %958 = vmatpush1.bf16.msra.mxu0 %v305
        %959 = vmatprep.subr.bf16.mxu0 0
        %960 = vmatpush1.bf16.msra.mxu0 %v304
        %961 = vmatprep.subr.bf16.mxu0 0
        %962 = vmatpush1.bf16.msra.mxu0 %v303
        %963 = vmatprep.subr.bf16.mxu0 0
        %964 = vmatpush2.bf16.msra.mxu0 0
        %965 = vmatprep.subr.bf16.mxu0 0
        %966 = vmatpush2.bf16.msra.mxu0 0
        %967 = vmatprep.subr.bf16.mxu0 0
        %968 = vmatpush2.bf16.msra.mxu0 0
        %969 = vmatprep.subr.bf16.mxu0 0
        %970 = vmatpush2.bf16.msra.mxu0 0
        %971 = vmatprep.subr.bf16.mxu0 0
        %972 = vmatpush2.bf16.msra.mxu0 0
        %973 = vmatprep.subr.bf16.mxu0 0
        %974 = vmatpush2.bf16.msra.mxu0 0
        %975 = vmatprep.subr.bf16.mxu0 0
        %976 = vmatpush2.bf16.msra.mxu0 0
        %977 = vmatprep.subr.bf16.mxu0 0
        %978 = vmatpush2.bf16.msra.mxu0 0
        %979 = vmatprep.mubr.bf16.mxu0 0
        %980 = vmatmul.mubr.bf16.gmra.mxu0 %v936
        %v981 = vpop.f32.mrf.mxu0
        %v982 = vadd.f32 %v253, %v981
        %v983 = vpop.f32.mrf.mxu0
        %v984 = vpop.f32.mrf.mxu0
        %v985 = vadd.f32 %v253, %v984
        %v986 = vpop.f32.mrf.mxu0
        %987 = vmatprep.mubr.bf16.mxu0 0
        %988 = vmatmul.mubr.bf16.gmra.mxu0 %v939
        %v989 = vpop.f32.mrf.mxu0
        %v990 = vadd.f32 %v253, %v989
        %v991 = vpop.f32.mrf.mxu0
        %v992 = vpop.f32.mrf.mxu0
        %v993 = vadd.f32 %v253, %v992
        %v994 = vpop.f32.mrf.mxu0
        %995 = vmatprep.mubr.bf16.mxu0 0
        %996 = vmatmul.mubr.bf16.gmra.mxu0 %v942
        %v997 = vpop.f32.mrf.mxu0
        %v998 = vadd.f32 %v253, %v997
        %v999 = vpop.f32.mrf.mxu0
        %v1000 = vpop.f32.mrf.mxu0
        %v1001 = vadd.f32 %v253, %v1000
        %v1002 = vpop.f32.mrf.mxu0
        %1003 = vmatprep.mubr.bf16.mxu0 0
        %1004 = vmatmul.mubr.bf16.gmra.mxu0 %v945
        %v1005 = vpop.f32.mrf.mxu0
        %v1006 = vadd.f32 %v253, %v1005
        %v1007 = vpop.f32.mrf.mxu0
        %v1008 = vpop.f32.mrf.mxu0
        %v1009 = vadd.f32 %v253, %v1008
        %v1010 = vpop.f32.mrf.mxu0
        %1011 = vdwg.mxu0
        %v1012 = vmax.f32 %v982, 0.0
        %v1013 = vmax.f32 %v985, 0.0
        %v1014 = vmax.f32 %v990, 0.0
        %v1015 = vmax.f32 %v993, 0.0
        %v1016 = vmax.f32 %v998, 0.0
        %v1017 = vmax.f32 %v1001, 0.0
        %v1018 = vmax.f32 %v1006, 0.0
        %v1019 = vmax.f32 %v1009, 0.0
        %s1020 = scalar_lea.vmem %s222, 320 [#allocation7]
        %1021 = vst [vmem:[%s1020] sm:$0xff] %v1012
        %1022 = vst [vmem:[%s1020 + $0x8] sm:$0xff] %v1013
        %1023 = vst [vmem:[%s1020 + $0x10] sm:$0xff] %v1014
        %1024 = vst [vmem:[%s1020 + $0x18] sm:$0xff] %v1015
        %1025 = vst [vmem:[%s1020 + $0x20] sm:$0xff] %v1016
        %1026 = vst [vmem:[%s1020 + $0x28] sm:$0xff] %v1017
        %1027 = vst [vmem:[%s1020 + $0x30] sm:$0xff] %v1018
        %1028 = vst [vmem:[%s1020 + $0x38] sm:$0xff] %v1019
        %s1029 = scalar_lea.vmem %s196, 192 [#allocation2]
        %v1030 = vld [vmem:[%s1029] sm:$0xf]
        %v1031 = vld [vmem:[%s1029 + $0x4] sm:$0xf]
        %v1032 = vld [vmem:[%s1029 + $0x8] sm:$0xf]
        %v1033 = vld [vmem:[%s1029 + $0xc] sm:$0xf]
        %v1034 = vld [vmem:[%s1029 + $0x10] sm:$0xf]
        %v1035 = vld [vmem:[%s1029 + $0x14] sm:$0xf]
        %v1036 = vld [vmem:[%s1029 + $0x18] sm:$0xf]
        %v1037 = vld [vmem:[%s1029 + $0x1c] sm:$0xf]
        %v1046 = vunpack.c.l.b16 %v1030
        %v1047 = vunpack.c.l.b16 %v1031
        %v1048 = vunpack.c.l.b16 %v1032
        %v1049 = vunpack.c.l.b16 %v1033
        %v1050 = vunpack.c.l.b16 %v1034
        %v1051 = vunpack.c.l.b16 %v1035
        %v1052 = vunpack.c.l.b16 %v1036
        %v1053 = vunpack.c.l.b16 %v1037
        %v1054 = vpack.c.b16 %v1047, %v1046
        %v1055 = vpack.c.b16 %v1049, %v1048
        %v1056 = vpack.c.b16 %v1051, %v1050
        %v1057 = vpack.c.b16 %v1053, %v1052
        %v1059 = vsel %vm316, %v1054, 0
        %v1062 = vsel %vm316, %v1055, 0
        %v1065 = vsel %vm316, %v1056, 0
        %v1068 = vsel %vm316, %v1057, 0
        %1070 = vmatprep.subr.bf16.mxu0 0
        %1071 = vmatpush1.bf16.msra.mxu0 0
        %1072 = vmatprep.subr.bf16.mxu0 0
        %1073 = vmatpush1.bf16.msra.mxu0 %v331
        %1074 = vmatprep.subr.bf16.mxu0 0
        %1075 = vmatpush1.bf16.msra.mxu0 %v308
        %1076 = vmatprep.subr.bf16.mxu0 0
        %1077 = vmatpush1.bf16.msra.mxu0 %v307
        %1078 = vmatprep.subr.bf16.mxu0 0
        %1079 = vmatpush1.bf16.msra.mxu0 %v306
        %1080 = vmatprep.subr.bf16.mxu0 0
        %1081 = vmatpush1.bf16.msra.mxu0 %v305
        %1082 = vmatprep.subr.bf16.mxu0 0
        %1083 = vmatpush1.bf16.msra.mxu0 %v304
        %1084 = vmatprep.subr.bf16.mxu0 0
        %1085 = vmatpush1.bf16.msra.mxu0 %v303
        %1086 = vmatprep.subr.bf16.mxu0 0
        %1087 = vmatpush2.bf16.msra.mxu0 0
        %1088 = vmatprep.subr.bf16.mxu0 0
        %1089 = vmatpush2.bf16.msra.mxu0 0
        %1090 = vmatprep.subr.bf16.mxu0 0
        %1091 = vmatpush2.bf16.msra.mxu0 0
        %1092 = vmatprep.subr.bf16.mxu0 0
        %1093 = vmatpush2.bf16.msra.mxu0 0
        %1094 = vmatprep.subr.bf16.mxu0 0
        %1095 = vmatpush2.bf16.msra.mxu0 0
        %1096 = vmatprep.subr.bf16.mxu0 0
        %1097 = vmatpush2.bf16.msra.mxu0 0
        %1098 = vmatprep.subr.bf16.mxu0 0
        %1099 = vmatpush2.bf16.msra.mxu0 0
        %1100 = vmatprep.subr.bf16.mxu0 0
        %1101 = vmatpush2.bf16.msra.mxu0 0
        %1102 = vmatprep.mubr.bf16.mxu0 0
        %1103 = vmatmul.mubr.bf16.gmra.mxu0 %v1059
        %v1104 = vpop.f32.mrf.mxu0
        %v1105 = vadd.f32 %v253, %v1104
        %v1106 = vpop.f32.mrf.mxu0
        %v1107 = vpop.f32.mrf.mxu0
        %v1108 = vadd.f32 %v253, %v1107
        %v1109 = vpop.f32.mrf.mxu0
        %1110 = vmatprep.mubr.bf16.mxu0 0
        %1111 = vmatmul.mubr.bf16.gmra.mxu0 %v1062
        %v1112 = vpop.f32.mrf.mxu0
        %v1113 = vadd.f32 %v253, %v1112
        %v1114 = vpop.f32.mrf.mxu0
        %v1115 = vpop.f32.mrf.mxu0
        %v1116 = vadd.f32 %v253, %v1115
        %v1117 = vpop.f32.mrf.mxu0
        %1118 = vmatprep.mubr.bf16.mxu0 0
        %1119 = vmatmul.mubr.bf16.gmra.mxu0 %v1065
        %v1120 = vpop.f32.mrf.mxu0
        %v1121 = vadd.f32 %v253, %v1120
        %v1122 = vpop.f32.mrf.mxu0
        %v1123 = vpop.f32.mrf.mxu0
        %v1124 = vadd.f32 %v253, %v1123
        %v1125 = vpop.f32.mrf.mxu0
        %1126 = vmatprep.mubr.bf16.mxu0 0
        %1127 = vmatmul.mubr.bf16.gmra.mxu0 %v1068
        %v1128 = vpop.f32.mrf.mxu0
        %v1129 = vadd.f32 %v253, %v1128
        %v1130 = vpop.f32.mrf.mxu0
        %v1131 = vpop.f32.mrf.mxu0
        %v1132 = vadd.f32 %v253, %v1131
        %v1133 = vpop.f32.mrf.mxu0
        %1134 = vdwg.mxu0
        %v1135 = vmax.f32 %v1105, 0.0
        %v1136 = vmax.f32 %v1108, 0.0
        %v1137 = vmax.f32 %v1113, 0.0
        %v1138 = vmax.f32 %v1116, 0.0
        %v1139 = vmax.f32 %v1121, 0.0
        %v1140 = vmax.f32 %v1124, 0.0
        %v1141 = vmax.f32 %v1129, 0.0
        %v1142 = vmax.f32 %v1132, 0.0
        %s1143 = scalar_lea.vmem %s222, 384 [#allocation7]
        %1144 = vst [vmem:[%s1143] sm:$0xff] %v1135
        %1145 = vst [vmem:[%s1143 + $0x8] sm:$0xff] %v1136
        %1146 = vst [vmem:[%s1143 + $0x10] sm:$0xff] %v1137
        %1147 = vst [vmem:[%s1143 + $0x18] sm:$0xff] %v1138
        %1148 = vst [vmem:[%s1143 + $0x20] sm:$0xff] %v1139
        %1149 = vst [vmem:[%s1143 + $0x28] sm:$0xff] %v1140
        %1150 = vst [vmem:[%s1143 + $0x30] sm:$0xff] %v1141
        %1151 = vst [vmem:[%s1143 + $0x38] sm:$0xff] %v1142
        %s1152 = scalar_lea.vmem %s196, 224 [#allocation2]
        %v1153 = vld [vmem:[%s1152] sm:$0xf]
        %v1154 = vld [vmem:[%s1152 + $0x4] sm:$0xf]
        %v1155 = vld [vmem:[%s1152 + $0x8] sm:$0xf]
        %v1156 = vld [vmem:[%s1152 + $0xc] sm:$0xf]
        %v1157 = vld [vmem:[%s1152 + $0x10] sm:$0xf]
        %v1158 = vld [vmem:[%s1152 + $0x14] sm:$0xf]
        %v1159 = vld [vmem:[%s1152 + $0x18] sm:$0xf]
        %v1160 = vld [vmem:[%s1152 + $0x1c] sm:$0xf]
        %v1169 = vunpack.c.l.b16 %v1153
        %v1170 = vunpack.c.l.b16 %v1154
        %v1171 = vunpack.c.l.b16 %v1155
        %v1172 = vunpack.c.l.b16 %v1156
        %v1173 = vunpack.c.l.b16 %v1157
        %v1174 = vunpack.c.l.b16 %v1158
        %v1175 = vunpack.c.l.b16 %v1159
        %v1176 = vunpack.c.l.b16 %v1160
        %v1177 = vpack.c.b16 %v1170, %v1169
        %v1178 = vpack.c.b16 %v1172, %v1171
        %v1179 = vpack.c.b16 %v1174, %v1173
        %v1180 = vpack.c.b16 %v1176, %v1175
        %v1182 = vsel %vm316, %v1177, 0
        %v1185 = vsel %vm316, %v1178, 0
        %v1188 = vsel %vm316, %v1179, 0
        %v1191 = vsel %vm316, %v1180, 0
        %1193 = vmatprep.subr.bf16.mxu0 0
        %1194 = vmatpush1.bf16.msra.mxu0 0
        %1195 = vmatprep.subr.bf16.mxu0 0
        %1196 = vmatpush1.bf16.msra.mxu0 %v331
        %1197 = vmatprep.subr.bf16.mxu0 0
        %1198 = vmatpush1.bf16.msra.mxu0 %v308
        %1199 = vmatprep.subr.bf16.mxu0 0
        %1200 = vmatpush1.bf16.msra.mxu0 %v307
        %1201 = vmatprep.subr.bf16.mxu0 0
        %1202 = vmatpush1.bf16.msra.mxu0 %v306
        %1203 = vmatprep.subr.bf16.mxu0 0
        %1204 = vmatpush1.bf16.msra.mxu0 %v305
        %1205 = vmatprep.subr.bf16.mxu0 0
        %1206 = vmatpush1.bf16.msra.mxu0 %v304
        %1207 = vmatprep.subr.bf16.mxu0 0
        %1208 = vmatpush1.bf16.msra.mxu0 %v303
        %1209 = vmatprep.subr.bf16.mxu0 0
        %1210 = vmatpush2.bf16.msra.mxu0 0
        %1211 = vmatprep.subr.bf16.mxu0 0
        %1212 = vmatpush2.bf16.msra.mxu0 0
        %1213 = vmatprep.subr.bf16.mxu0 0
        %1214 = vmatpush2.bf16.msra.mxu0 0
        %1215 = vmatprep.subr.bf16.mxu0 0
        %1216 = vmatpush2.bf16.msra.mxu0 0
        %1217 = vmatprep.subr.bf16.mxu0 0
        %1218 = vmatpush2.bf16.msra.mxu0 0
        %1219 = vmatprep.subr.bf16.mxu0 0
        %1220 = vmatpush2.bf16.msra.mxu0 0
        %1221 = vmatprep.subr.bf16.mxu0 0
        %1222 = vmatpush2.bf16.msra.mxu0 0
        %1223 = vmatprep.subr.bf16.mxu0 0
        %1224 = vmatpush2.bf16.msra.mxu0 0
        %1225 = vmatprep.mubr.bf16.mxu0 0
        %1226 = vmatmul.mubr.bf16.gmra.mxu0 %v1182
        %v1227 = vpop.f32.mrf.mxu0
        %v1228 = vadd.f32 %v253, %v1227
        %v1229 = vpop.f32.mrf.mxu0
        %v1230 = vpop.f32.mrf.mxu0
        %v1231 = vadd.f32 %v253, %v1230
        %v1232 = vpop.f32.mrf.mxu0
        %1233 = vmatprep.mubr.bf16.mxu0 0
        %1234 = vmatmul.mubr.bf16.gmra.mxu0 %v1185
        %v1235 = vpop.f32.mrf.mxu0
        %v1236 = vadd.f32 %v253, %v1235
        %v1237 = vpop.f32.mrf.mxu0
        %v1238 = vpop.f32.mrf.mxu0
        %v1239 = vadd.f32 %v253, %v1238
        %v1240 = vpop.f32.mrf.mxu0
        %1241 = vmatprep.mubr.bf16.mxu0 0
        %1242 = vmatmul.mubr.bf16.gmra.mxu0 %v1188
        %v1243 = vpop.f32.mrf.mxu0
        %v1244 = vadd.f32 %v253, %v1243
        %v1245 = vpop.f32.mrf.mxu0
        %v1246 = vpop.f32.mrf.mxu0
        %v1247 = vadd.f32 %v253, %v1246
        %v1248 = vpop.f32.mrf.mxu0
        %1249 = vmatprep.mubr.bf16.mxu0 0
        %1250 = vmatmul.mubr.bf16.gmra.mxu0 %v1191
        %v1251 = vpop.f32.mrf.mxu0
        %v1252 = vadd.f32 %v253, %v1251
        %v1253 = vpop.f32.mrf.mxu0
        %v1254 = vpop.f32.mrf.mxu0
        %v1255 = vadd.f32 %v253, %v1254
        %v1256 = vpop.f32.mrf.mxu0
        %1257 = vdwg.mxu0
        %v1258 = vmax.f32 %v1228, 0.0
        %v1259 = vmax.f32 %v1231, 0.0
        %v1260 = vmax.f32 %v1236, 0.0
        %v1261 = vmax.f32 %v1239, 0.0
        %v1262 = vmax.f32 %v1244, 0.0
        %v1263 = vmax.f32 %v1247, 0.0
        %v1264 = vmax.f32 %v1252, 0.0
        %v1265 = vmax.f32 %v1255, 0.0
        %s1266 = scalar_lea.vmem %s222, 448 [#allocation7]
        %1267 = vst [vmem:[%s1266] sm:$0xff] %v1258
        %1268 = vst [vmem:[%s1266 + $0x8] sm:$0xff] %v1259
        %1269 = vst [vmem:[%s1266 + $0x10] sm:$0xff] %v1260
        %1270 = vst [vmem:[%s1266 + $0x18] sm:$0xff] %v1261
        %1271 = vst [vmem:[%s1266 + $0x20] sm:$0xff] %v1262
        %1272 = vst [vmem:[%s1266 + $0x28] sm:$0xff] %v1263
        %1273 = vst [vmem:[%s1266 + $0x30] sm:$0xff] %v1264
        %1274 = vst [vmem:[%s1266 + $0x38] sm:$0xff] %v1265
        %s1275 = sand.u32 %s113, 1
        %s1276 = scalar_lea.sflag [#allocation4], %s1275
        %s1277 = sand.u32 %s113, 1
        %s1278 = smul.addr %s1277, 512
        %s1279 = scalar_lea.vmem [#allocation7], %s1278
        // Predicated region
        $region41: #{tpu_custom_call.1} parent=31 // pred_check
          %p1280 = pneg %p123
        $region42: #{tpu_custom_call.1} parent=31 // pred_check_branch
          %1282 = sbr.rel (%p1280) target = $region44
        $region43: #{tpu_custom_call.1} parent=31 // pred_region
          %s1283 = smul.u32 8, %s26
          %s1285 = ssub.s32 8192, 8192
          %1286 = vsyncadd %s1276, %s1285
          %s1287 = smul.addr %s1283, 8
          %s1288 = smul.addr %s25, 64
          %s1289 = sadd.s32 %s1287, %s1288
          %s1290 = smul.addr %s1289, 128
          %s1291 = scalar_lea.hbm %s3, %s1290
          %s1292 = sshll.u32 %s1279, 4
          %s1293 = int_to_ptr.vmem [resolvable:$true] %s1292
          %1298 = dma.vmem_to_hbm [thread:$0]  %s1293, 8192, %s1291, %s1276, 128, 128, 8
        $region44: #{tpu_custom_call.1} parent=31 // pred_fallthru
          _
      $region32: #{tpu_custom_call.1} parent=5 // pred_fallthru
        _
      %p1299 = scmp.le.s32.totalorder 2, %s16
      // Predicated region
      $region45: #{tpu_custom_call.1} parent=5 // pred_check
        %p1300 = pneg %p1299
      $region46: #{tpu_custom_call.1} parent=5 // pred_check_branch
        %1302 = sbr.rel (%p1300) target = $region48
      $region47: #{tpu_custom_call.1} parent=5 // pred_region
        %s1303 = ssub.s32 %s16, 2
        // Predicated region
        $region49: #{tpu_custom_call.1} parent=47 // pred_check
          %p1304 = pneg %p129
        $region50: #{tpu_custom_call.1} parent=47 // pred_check_branch
          %1306 = sbr.rel (%p1304) target = $region52
        $region51: #{tpu_custom_call.1} parent=47 // pred_region
          %s1307 = sand.u32 %s114, 1
          %s1308 = scalar_lea.sflag [#allocation4], %s1307
          %s1309 = sand.u32 %s114, 1
          %s1310 = smul.addr %s1309, 512
          %s1311 = scalar_lea.vmem [#allocation7], %s1310
          %1312 = dma.done %s1308, 8192
        $region52: #{tpu_custom_call.1} parent=47 // pred_fallthru
          _
      $region48: #{tpu_custom_call.1} parent=5 // pred_fallthru
        _
    $region6: #{tpu_custom_call.1} parent=1 // loop_footer
      %s20 = sadd.s32 1, %s16
    $region7: #{tpu_custom_call.1} parent=1 // loop_footer_branch
      %15 = sbr.rel target = $region3
    $region8: #{tpu_custom_call.1} parent=1 // loop_exit
      _
    %1313 = vsyncpa [#allocation3], 1
    %s1314 = scalar_lea.sflag [#allocation3], 1
    %1315 = vsyncpa %s1314, 1
    %1316 = vsyncpa [#allocation6], 1
    %1317 = vsyncpa [#allocation4], 1
    %s1318 = scalar_lea.sflag [#allocation4], 1
    %1319 = vsyncpa %s1318, 1

</llo_original>
